<compile_context>
chip_gen: v6e
topology: v6e:2x2x1
jax: 0.10.0
libtpu: 0.0.40
codegen_flags: <defaults>
</compile_context>

<pallas_src>
import functools
import math

import jax
import jax.numpy as jnp
from jax.experimental import pallas as pl
from jax.experimental.pallas import tpu as pltpu


def _round_up(x: int, m: int) -> int:
    return ((x + m - 1) // m) * m


@functools.lru_cache(maxsize=1)
def _vmem_capacity_bytes() -> int:
    """Per-core VMEM capacity (bytes); conservative fallback if unqueryable."""
    try:
        cap = getattr(pltpu.get_tpu_info(), "vmem_capacity_bytes", None)
        if cap:
            return int(cap)
    except Exception:
        pass
    return 64 << 20  # v7x per-TensorCore size: the conservative choice.


def _vmem_footprint(tm, Dp, th, weights_resident, w_it, x_it, out_it):
    """Rough resident-VMEM estimate (bytes) for one grid step."""
    n_wbuf = 1 if weights_resident else 2   # resident weights vs streamed tiles
    weights = 3 * Dp * th * w_it * n_wbuf   # gate + up + down tiles
    x_buf = 2 * tm * Dp * x_it              # double-buffered input tile
    o_buf = 2 * tm * Dp * out_it            # double-buffered output tile
    acc = tm * Dp * 4                       # f32 accumulator scratch
    inter = tm * th * (4 + 4 + w_it)        # g, u (f32) + gated (weight dtype)
    return weights + x_buf + o_buf + acc + inter


def _next_smaller_hidden_tile(Hp, th):
    """Largest multiple of 128 that divides Hp and is < th (>= 128)."""
    units = Hp // 128
    for k in range(th // 128 - 1, 0, -1):
        if units % k == 0:
            return k * 128
    return 128


def _swiglu_kernel(x_ref, wg_ref, wu_ref, wd_ref, o_ref, acc_ref):
    # x_ref:   (tm, Dp)  input rows, original dtype (cast to MXU dtype below)
    # wg_ref:  (Dp, th)  gate_proj weight tile, pre-transposed
    # wu_ref:  (Dp, th)  up_proj   weight tile, pre-transposed
    # wd_ref:  (th, Dp)  down_proj weight tile, pre-transposed
    # o_ref:   (tm, Dp)  output tile
    # acc_ref: (tm, Dp)  f32 accumulator for down-projection partial sums
    h_idx = pl.program_id(1)

    @pl.when(h_idx == 0)
    def _init():
        acc_ref[...] = jnp.zeros_like(acc_ref)

    # In-kernel activation cast: VPU work, hidden under the MXU pushes.
    x = x_ref[...].astype(wg_ref.dtype)

    # Two plain A @ B contractions on the MXU with f32 accumulation.
    g = jnp.dot(x, wg_ref[...], preferred_element_type=jnp.float32)
    u = jnp.dot(x, wu_ref[...], preferred_element_type=jnp.float32)

    # SiLU gating in f32 (VPU + EUP).
    gated = (g * jax.nn.sigmoid(g)) * u

    # Partial down projection for this hidden tile.
    acc_ref[...] += jnp.dot(gated.astype(wd_ref.dtype), wd_ref[...],
                            preferred_element_type=jnp.float32)

    @pl.when(h_idx == pl.num_programs(1) - 1)
    def _finalize():
        o_ref[...] = acc_ref[...].astype(o_ref.dtype)


def prepare_swiglu_weights(wg, wu, wd, dtype=jnp.bfloat16):
    """One-time weight prep (do this at init, not per forward call).

    wg, wu: [H, D]  (gate_proj.weight / up_proj.weight, PyTorch [out, in])
    wd:     [D, H]  (down_proj.weight, PyTorch [out, in])
    Returns (wgp, wup, wdp) pre-transposed, zero-padded to multiples of 128,
    cast to `dtype`:
      wgp, wup: [Dp, Hp]
      wdp:      [Hp, Dp]
    Zero padding is exact: padded hidden units give silu(0)*0 = 0 and padded
    output features are zero and sliced off by the wrapper.
    """
    H, D = wg.shape
    assert wu.shape == (H, D) and wd.shape == (D, H)
    Dp = _round_up(D, 128)
    Hp = _round_up(H, 128)
    wgp = jnp.pad(wg, ((0, Hp - H), (0, Dp - D))).T.astype(dtype)
    wup = jnp.pad(wu, ((0, Hp - H), (0, Dp - D))).T.astype(dtype)
    wdp = jnp.pad(wd, ((0, Dp - D), (0, Hp - H))).T.astype(dtype)
    return wgp, wup, wdp


@functools.partial(jax.jit, static_argnames=("tm", "out_dtype"))
def swiglu_ffn(x, wgp, wup, wdp, *, tm=None, out_dtype=None):
    """x: [..., D]; wgp/wup/wdp from prepare_swiglu_weights."""
    out_dtype = jnp.dtype(x.dtype if out_dtype is None else out_dtype)
    *lead, D = x.shape
    Dp, Hp = wgp.shape
    assert wup.shape == (Dp, Hp) and wdp.shape == (Hp, Dp) and D <= Dp

    w_it = jnp.dtype(wgp.dtype).itemsize
    x_it = jnp.dtype(x.dtype).itemsize
    out_it = out_dtype.itemsize

    vmem_cap = _vmem_capacity_bytes()
    budget = int(0.8 * vmem_cap)  # leave headroom for compiler-internal scratch

    # Row tile: 512 on 128-MiB chips (v5e/v6e), 256 on v7x (64 MiB per TC,
    # weights duplicated into both cores' VMEM by the "parallel" axis).
    if tm is None:
        tm = 512 if vmem_cap >= (96 << 20) else 256

    M = 1
    for d in lead:
        M *= d
    gran = 16  # covers both the f32 (8) and bf16 (16) sublane granules
    tm_eff = _round_up(max(1, min(tm, _round_up(M, gran))), gran)
    Mp = _round_up(M, tm_eff)
    grid_m = Mp // tm_eff
    # Keep the "parallel" axis at >= 2 steps when there is enough work so both
    # v7x TensorCores participate (a single extra step is harmless elsewhere).
    if grid_m == 1 and M >= 128:
        tm_eff = _round_up((M + 1) // 2, gran)
        Mp = _round_up(M, tm_eff)
        grid_m = Mp // tm_eff

    # Hidden tile: keep weights fully resident when they fit the budget,
    # otherwise stream (Dp, th) / (th, Dp) tiles over the "arbitrary" axis.
    th = Hp
    while th > 128 and _vmem_footprint(tm_eff, Dp, th, th == Hp,
                                       w_it, x_it, out_it) > budget:
        th = _next_smaller_hidden_tile(Hp, th)
    grid_h = Hp // th

    foot = _vmem_footprint(tm_eff, Dp, th, grid_h == 1, w_it, x_it, out_it)
    vmem_limit = int(min(max(foot + (8 << 20), 32 << 20), budget))

    # Aligned fast path: no pad / slice HBM passes when shapes already line up.
    x2 = x.reshape(M, D)
    if (Mp, Dp) != (M, D):
        x2 = jnp.pad(x2, ((0, Mp - M), (0, Dp - D)))

    # Grid-invariant (resident) weights do not need a second pipeline buffer;
    # streamed weight tiles use the default double-buffering.
    w_kwargs = {"pipeline_mode": pl.Buffered(1)} if grid_h == 1 else {}

    cost = pl.CostEstimate(
        flops=6 * Mp * Dp * Hp,              # gate + up + down matmuls
        transcendentals=Mp * Hp,             # sigmoid
        bytes_accessed=(Mp * Dp * (x_it + out_it)
                        + 3 * Dp * Hp * w_it * (grid_m if grid_h > 1 else 1)),
    )

    out = pl.pallas_call(
        _swiglu_kernel,
        out_shape=jax.ShapeDtypeStruct((Mp, Dp), out_dtype),
        grid_spec=pltpu.PrefetchScalarGridSpec(
            num_scalar_prefetch=0,
            grid=(grid_m, grid_h),
            in_specs=[
                pl.BlockSpec((tm_eff, Dp), lambda i, h: (i, 0)),
                pl.BlockSpec((Dp, th), lambda i, h: (0, h), **w_kwargs),
                pl.BlockSpec((Dp, th), lambda i, h: (0, h), **w_kwargs),
                pl.BlockSpec((th, Dp), lambda i, h: (h, 0), **w_kwargs),
            ],
            out_specs=pl.BlockSpec((tm_eff, Dp), lambda i, h: (i, 0)),
            scratch_shapes=[pltpu.VMEM((tm_eff, Dp), jnp.float32)],
        ),
        compiler_params=pltpu.CompilerParams(
            dimension_semantics=("parallel", "arbitrary"),
            vmem_limit_bytes=vmem_limit,
        ),
        cost_estimate=cost,
    )(x2, wgp, wup, wdp)

    if (Mp, Dp) != (M, D):
        out = out[:M, :D]
    return out.reshape(*lead, D)


def xavier_uniform(key, shape, dtype=jnp.float32):
    # nn.init.xavier_uniform_ for a Linear weight of shape (out, in)
    fan_out, fan_in = shape
    limit = math.sqrt(6.0 / (fan_in + fan_out))
    return jax.random.uniform(key, shape, dtype, minval=-limit, maxval=limit)


def swiglu_ref(x, wg, wu, wd):
    g = x @ wg.T
    u = x @ wu.T
    return (jax.nn.silu(g) * u) @ wd.T


if __name__ == "__main__":
    # Small shapes consistent with the module: dim=96, ff_mult=8/3 -> hidden=256
    B, S, D = 2, 8, 96
    H = int(D * (8 / 3))  # 256

    key = jax.random.PRNGKey(0)
    kx, kg, ku, kd = jax.random.split(key, 4)

    x = jax.random.normal(kx, (B, S, D), jnp.float32)
    wg = xavier_uniform(kg, (H, D))   # gate_proj.weight (PyTorch [out, in])
    wu = xavier_uniform(ku, (H, D))   # up_proj.weight
    wd = xavier_uniform(kd, (D, H))   # down_proj.weight

    # One-time weight prep: pre-transpose, pad to lane multiples, cast to bf16.
    wgp, wup, wdp = prepare_swiglu_weights(wg, wu, wd, dtype=jnp.bfloat16)

    out = swiglu_ffn(x, wgp, wup, wdp)
    jax.block_until_ready(out)

    ref = swiglu_ref(x, wg, wu, wd)
    assert out.shape == (B, S, D)
    max_err = float(jnp.max(jnp.abs(out - ref)))
    # bf16 MXU matmuls with f32 accumulation -> loosened tolerance vs f32 ref.
    assert jnp.allclose(out, ref, atol=5e-2, rtol=5e-2), (
        f"mismatch vs reference, max abs err {max_err}")

    print("KERNEL_OK")
</pallas_src>

<mosaic_0001>
module attributes {stable_mosaic.version = 11 : i64} {
  func.func @_swiglu_kernel(%arg0: i32, %arg1: i32, %arg2: memref<16x128xf32, #tpu.memory_space<vmem>>, %arg3: memref<128x256xbf16, #tpu.memory_space<vmem>>, %arg4: memref<128x256xbf16, #tpu.memory_space<vmem>>, %arg5: memref<256x128xbf16, #tpu.memory_space<vmem>>, %arg6: memref<16x128xf32, #tpu.memory_space<vmem>>, %arg7: memref<16x128xf32, #tpu.memory_space<vmem>>) attributes {dimension_semantics = [#tpu.dimension_semantics<parallel>, #tpu.dimension_semantics<arbitrary>], iteration_bounds = array<i64: 1, 1>, scalar_prefetch = 0 : i64, scratch_operands = 1 : i64, tpu.core_type = #tpu.core_type<tc>, window_params = [{transform_indices = @transform_0, window_bounds = array<i64: 16, 128>}, {pipeline_mode = #tpu.pipeline_mode<synchronous>, transform_indices = @transform_1, window_bounds = array<i64: 128, 256>}, {pipeline_mode = #tpu.pipeline_mode<synchronous>, transform_indices = @transform_2, window_bounds = array<i64: 128, 256>}, {pipeline_mode = #tpu.pipeline_mode<synchronous>, transform_indices = @transform_3, window_bounds = array<i64: 256, 128>}, {transform_indices = @transform_4, window_bounds = array<i64: 16, 128>}]} {
    %c0_i32 = arith.constant 0 : i32
    %0 = arith.cmpi eq, %arg1, %c0_i32 : i32
    %1 = arith.extui %0 : i1 to i32
    %c0_i32_0 = arith.constant 0 : i32
    %2 = arith.cmpi ne, %1, %c0_i32_0 : i32
    scf.if %2 {
      %cst_17 = arith.constant 0.000000e+00 : f32
      %25 = vector.broadcast %cst_17 : f32 to vector<16x128xf32>
      %c0_18 = arith.constant 0 : index
      %c0_19 = arith.constant 0 : index
      %26 = vector.load %arg7[%c0_18, %c0_19] : memref<16x128xf32, #tpu.memory_space<vmem>>, vector<16x128xf32>
      tpu.vector_store %arg7[%c0_18, %c0_19], %25 {strides = array<i32>} : memref<16x128xf32, #tpu.memory_space<vmem>>, vector<16x128xf32>,
    } else {
    }
    %c0 = arith.constant 0 : index
    %c0_1 = arith.constant 0 : index
    %3 = vector.load %arg2[%c0, %c0_1] : memref<16x128xf32, #tpu.memory_space<vmem>>, vector<16x128xf32>
    %4 = arith.truncf %3 : vector<16x128xf32> to vector<16x128xbf16>
    %c0_2 = arith.constant 0 : index
    %c0_3 = arith.constant 0 : index
    %5 = vector.load %arg3[%c0_2, %c0_3] : memref<128x256xbf16, #tpu.memory_space<vmem>>, vector<128x256xbf16>
    %cst = arith.constant dense<0.000000e+00> : vector<16x256xf32>
    %6 = tpu.matmul %4, %5, %cst {dimension_numbers = #tpu.dot_dimension_numbers<[1], [0], [0], [1], [0, 0, 1, 1], [], []>} : vector<16x128xbf16>, vector<128x256xbf16>, vector<16x256xf32> -> vector<16x256xf32>
    %c0_4 = arith.constant 0 : index
    %c0_5 = arith.constant 0 : index
    %7 = vector.load %arg4[%c0_4, %c0_5] : memref<128x256xbf16, #tpu.memory_space<vmem>>, vector<128x256xbf16>
    %cst_6 = arith.constant dense<0.000000e+00> : vector<16x256xf32>
    %8 = tpu.matmul %4, %7, %cst_6 {dimension_numbers = #tpu.dot_dimension_numbers<[1], [0], [0], [1], [0, 0, 1, 1], [], []>} : vector<16x128xbf16>, vector<128x256xbf16>, vector<16x256xf32> -> vector<16x256xf32>
    %9 = arith.negf %6 : vector<16x256xf32>
    %10 = math.exp %9 : vector<16x256xf32>
    %cst_7 = arith.constant 1.000000e+00 : f32
    %11 = vector.broadcast %cst_7 : f32 to vector<16x256xf32>
    %12 = arith.addf %11, %10 : vector<16x256xf32>
    %13 = arith.divf %11, %12 : vector<16x256xf32>
    %14 = arith.mulf %6, %13 : vector<16x256xf32>
    %15 = arith.mulf %14, %8 : vector<16x256xf32>
    %c0_8 = arith.constant 0 : index
    %c0_9 = arith.constant 0 : index
    %16 = vector.load %arg7[%c0_8, %c0_9] : memref<16x128xf32, #tpu.memory_space<vmem>>, vector<16x128xf32>
    %17 = arith.truncf %15 : vector<16x256xf32> to vector<16x256xbf16>
    %c0_10 = arith.constant 0 : index
    %c0_11 = arith.constant 0 : index
    %18 = vector.load %arg5[%c0_10, %c0_11] : memref<256x128xbf16, #tpu.memory_space<vmem>>, vector<256x128xbf16>
    %cst_12 = arith.constant dense<0.000000e+00> : vector<16x128xf32>
    %19 = tpu.matmul %17, %18, %cst_12 {dimension_numbers = #tpu.dot_dimension_numbers<[1], [0], [0], [1], [0, 0, 1, 1], [], []>} : vector<16x256xbf16>, vector<256x128xbf16>, vector<16x128xf32> -> vector<16x128xf32>
    %20 = arith.addf %16, %19 : vector<16x128xf32>
    %c0_13 = arith.constant 0 : index
    %c0_14 = arith.constant 0 : index
    %21 = vector.load %arg7[%c0_13, %c0_14] : memref<16x128xf32, #tpu.memory_space<vmem>>, vector<16x128xf32>
    tpu.vector_store %arg7[%c0_13, %c0_14], %20 {strides = array<i32>} : memref<16x128xf32, #tpu.memory_space<vmem>>, vector<16x128xf32>,
    %c0_i32_15 = arith.constant 0 : i32
    %22 = arith.cmpi eq, %arg1, %c0_i32_15 : i32
    %23 = arith.extui %22 : i1 to i32
    %c0_i32_16 = arith.constant 0 : i32
    %24 = arith.cmpi ne, %23, %c0_i32_16 : i32
    scf.if %24 {
      %c0_17 = arith.constant 0 : index
      %c0_18 = arith.constant 0 : index
      %25 = vector.load %arg7[%c0_17, %c0_18] : memref<16x128xf32, #tpu.memory_space<vmem>>, vector<16x128xf32>
      %c0_19 = arith.constant 0 : index
      %c0_20 = arith.constant 0 : index
      %26 = vector.load %arg6[%c0_19, %c0_20] : memref<16x128xf32, #tpu.memory_space<vmem>>, vector<16x128xf32>
      tpu.vector_store %arg6[%c0_19, %c0_20], %25 {strides = array<i32>} : memref<16x128xf32, #tpu.memory_space<vmem>>, vector<16x128xf32>,
    } else {
    }
    return
  }
  func.func @transform_0(%arg0: i32, %arg1: i32) -> (i32, i32) {
    %c0_i32 = arith.constant 0 : i32
    %c0_i32_0 = arith.constant 0 : i32
    return %arg0, %c0_i32 : i32, i32
  }
  func.func @transform_1(%arg0: i32, %arg1: i32) -> (i32, i32) {
    %c0_i32 = arith.constant 0 : i32
    %c0_i32_0 = arith.constant 0 : i32
    return %c0_i32, %arg1 : i32, i32
  }
  func.func @transform_2(%arg0: i32, %arg1: i32) -> (i32, i32) {
    %c0_i32 = arith.constant 0 : i32
    %c0_i32_0 = arith.constant 0 : i32
    return %c0_i32, %arg1 : i32, i32
  }
  func.func @transform_3(%arg0: i32, %arg1: i32) -> (i32, i32) {
    %c0_i32 = arith.constant 0 : i32
    %c0_i32_0 = arith.constant 0 : i32
    return %arg1, %c0_i32 : i32, i32
  }
  func.func @transform_4(%arg0: i32, %arg1: i32) -> (i32, i32) {
    %c0_i32 = arith.constant 0 : i32
    %c0_i32_0 = arith.constant 0 : i32
    return %arg0, %c0_i32 : i32, i32
  }
}

</mosaic_0001>

<llo_original>
// kernel: swiglu_ffn.1
$region0: #{swiglu_ffn.1}
  #allocation0 [shape = 'u32[]', space=smem, size = 0x4, offset = 0x4, fixed_abs, tag = 'smem constant byte address 0x4 - core index']
  #allocation1 [shape = 'u32[144,128]{1,0:T(1,128)}', space=vmem, size = 0x12000, scoped, tag = 'internal scratch']
  #allocation2 [shape = 'f32[16,128]{1,0:T(8,128)}', space=vmem, size = 0x2000, scoped, tag = 'scratch operand']
  %s0 = inlined_call_operand.vmem [shape: f32[16,128], index: 0, kind: input, shape index: {}]
  %s1 = inlined_call_operand.hbm [shape: bf16[128,256], index: 1, kind: input, shape index: {}]
  %s2 = inlined_call_operand.hbm [shape: bf16[128,256], index: 2, kind: input, shape index: {}]
  %s3 = inlined_call_operand.hbm [shape: bf16[256,128], index: 3, kind: input, shape index: {}]
  %s4 = inlined_call_operand.vmem [shape: f32[16,128], index: 4, kind: output, shape index: {}]
  %s5 = sld [smem:[#allocation0]]
  $region46: #{swiglu_ffn.1} parent=0
    _
  %s7 = ssub.s32 1, %s5
  %s8 = scalar_select 0, %s7, %s5
  $region1: #{swiglu_ffn.1} parent=0
    #allocation3 [shape = 'u8[65536]{0}', space=vmem, size = 0x10000, scoped, tag = 'input window, operand 1, single buffered']
    #allocation4 [shape = 's32[1]{0}', space=sflag, size = 0x4, scoped, tag = 'scoped memory for swiglu_ffn.1']
    #allocation5 [shape = 'u8[65536]{0}', space=vmem, size = 0x10000, scoped, tag = 'input window, operand 2, single buffered']
    #allocation6 [shape = 's32[1]{0}', space=sflag, size = 0x4, scoped, tag = 'scoped memory for swiglu_ffn.1']
    #allocation7 [shape = 'u8[65536]{0}', space=vmem, size = 0x10000, scoped, tag = 'input window, operand 3, single buffered']
    %9 = vsyncpa [#allocation4], 0
    %10 = vsyncpa [#allocation6], 0
    // Predicated region
    $region2: #{swiglu_ffn.1} parent=1 // pred_check
      _
    $region3: #{swiglu_ffn.1} parent=1 // pred_check_branch
      %12 = sbr.rel (0) target = $region5
    $region4: #{swiglu_ffn.1} parent=1 // pred_region
      _
    $region5: #{swiglu_ffn.1} parent=1 // pred_fallthru
      _
    // Predicated region
    $region6: #{swiglu_ffn.1} parent=1 // pred_check
      _
    $region7: #{swiglu_ffn.1} parent=1 // pred_check_branch
      %14 = sbr.rel (0) target = $region9
    $region8: #{swiglu_ffn.1} parent=1 // pred_region
      %s16 = ssub.s32 2048, 2048
      %17 = vsyncadd [#allocation4], %s16
      %s18 = sshll.u32 [#allocation3], 4
      %s19 = int_to_ptr.vmem [resolvable:$true] %s18
      %24 = dma.hbm_to_vmem [thread:$0]  %s1, 2048, %s19, [#allocation4], 128, 128, 8
    $region9: #{swiglu_ffn.1} parent=1 // pred_fallthru
      _
    // Predicated region
    $region10: #{swiglu_ffn.1} parent=1 // pred_check
      _
    $region11: #{swiglu_ffn.1} parent=1 // pred_check_branch
      %26 = sbr.rel (0) target = $region13
    $region12: #{swiglu_ffn.1} parent=1 // pred_region
      %s28 = ssub.s32 2048, 2048
      %29 = vsyncadd [#allocation6], %s28
      %s30 = sshll.u32 [#allocation5], 4
      %s31 = int_to_ptr.vmem [resolvable:$true] %s30
      %36 = dma.hbm_to_vmem [thread:$0]  %s2, 2048, %s31, [#allocation6], 128, 128, 8
    $region13: #{swiglu_ffn.1} parent=1 // pred_fallthru
      _
    // Predicated region
    $region14: #{swiglu_ffn.1} parent=1 // pred_check
      _
    $region15: #{swiglu_ffn.1} parent=1 // pred_check_branch
      %38 = sbr.rel (0) target = $region17
    $region16: #{swiglu_ffn.1} parent=1 // pred_region
      %s40 = ssub.s32 2048, 2048
      %41 = vsyncadd [#allocation6], %s40
      %s42 = sshll.u32 [#allocation7], 4
      %s43 = int_to_ptr.vmem [resolvable:$true] %s42
      %48 = dma.hbm_to_vmem [thread:$0]  %s3, 2048, %s43, [#allocation6], 64, 64, 4
    $region17: #{swiglu_ffn.1} parent=1 // pred_fallthru
      _
    // Predicated region
    $region18: #{swiglu_ffn.1} parent=1 // pred_check
      _
    $region19: #{swiglu_ffn.1} parent=1 // pred_check_branch
      %50 = sbr.rel (0) target = $region21
    $region20: #{swiglu_ffn.1} parent=1 // pred_region
      %51 = dma.done [#allocation4], 2048
    $region21: #{swiglu_ffn.1} parent=1 // pred_fallthru
      _
    // Predicated region
    $region22: #{swiglu_ffn.1} parent=1 // pred_check
      _
    $region23: #{swiglu_ffn.1} parent=1 // pred_check_branch
      %53 = sbr.rel (0) target = $region25
    $region24: #{swiglu_ffn.1} parent=1 // pred_region
      %54 = dma.done [#allocation6], 2048
    $region25: #{swiglu_ffn.1} parent=1 // pred_fallthru
      _
    // Predicated region
    $region26: #{swiglu_ffn.1} parent=1 // pred_check
      _
    $region27: #{swiglu_ffn.1} parent=1 // pred_check_branch
      %56 = sbr.rel (0) target = $region29
    $region28: #{swiglu_ffn.1} parent=1 // pred_region
      %57 = dma.done [#allocation6], 2048
    $region29: #{swiglu_ffn.1} parent=1 // pred_fallthru
      _
    %p59 = scmp.eq.s32.totalorder 0, 0
    // Predicated region
    $region30: #{swiglu_ffn.1} parent=1 // pred_check
      %p60 = pneg %p59
    $region31: #{swiglu_ffn.1} parent=1 // pred_check_branch
      %62 = sbr.rel (%p60) target = $region33
    $region32: #{swiglu_ffn.1} parent=1 // pred_region
      %63 = vst [vmem:[#allocation2] sm:$0xff] 0.0
      %64 = vst [vmem:[#allocation2 + $0x8] sm:$0xff] 0.0
    $region33: #{swiglu_ffn.1} parent=1 // pred_fallthru
      _
    %v65 = vld [vmem:[%s0] sm:$0xff]
    %v66 = vld [vmem:[%s0 + $0x8] sm:$0xff]
    %v67 = vpack.c.bf16 %v66, %v65
    %v68 = vld [vmem:[#allocation3] sm:$0xff]
    %v69 = vld [vmem:[#allocation3 + $0x8] sm:$0xff]
    %v70 = vld [vmem:[#allocation3 + $0x10] sm:$0xff]
    %v71 = vld [vmem:[#allocation3 + $0x18] sm:$0xff]
    %v72 = vld [vmem:[#allocation3 + $0x20] sm:$0xff]
    %v73 = vld [vmem:[#allocation3 + $0x28] sm:$0xff]
    %v74 = vld [vmem:[#allocation3 + $0x30] sm:$0xff]
    %v75 = vld [vmem:[#allocation3 + $0x38] sm:$0xff]
    %v76 = vld [vmem:[#allocation3 + $0x40] sm:$0xff]
    %v77 = vld [vmem:[#allocation3 + $0x48] sm:$0xff]
    %v78 = vld [vmem:[#allocation3 + $0x50] sm:$0xff]
    %v79 = vld [vmem:[#allocation3 + $0x58] sm:$0xff]
    %v80 = vld [vmem:[#allocation3 + $0x60] sm:$0xff]
    %v81 = vld [vmem:[#allocation3 + $0x68] sm:$0xff]
    %v82 = vld [vmem:[#allocation3 + $0x70] sm:$0xff]
    %v83 = vld [vmem:[#allocation3 + $0x78] sm:$0xff]
    %v100 = vunpack.c.l.b16 %v68
    %v101 = vunpack.c.h.b16 %v68
    %v102 = vunpack.c.l.b16 %v69
    %v103 = vunpack.c.h.b16 %v69
    %v104 = vunpack.c.l.b16 %v70
    %v105 = vunpack.c.h.b16 %v70
    %v106 = vunpack.c.l.b16 %v71
    %v107 = vunpack.c.h.b16 %v71
    %v108 = vunpack.c.l.b16 %v72
    %v109 = vunpack.c.h.b16 %v72
    %v110 = vunpack.c.l.b16 %v73
    %v111 = vunpack.c.h.b16 %v73
    %v112 = vunpack.c.l.b16 %v74
    %v113 = vunpack.c.h.b16 %v74
    %v114 = vunpack.c.l.b16 %v75
    %v115 = vunpack.c.h.b16 %v75
    %v116 = vunpack.c.l.b16 %v76
    %v117 = vunpack.c.h.b16 %v76
    %v118 = vunpack.c.l.b16 %v77
    %v119 = vunpack.c.h.b16 %v77
    %v120 = vunpack.c.l.b16 %v78
    %v121 = vunpack.c.h.b16 %v78
    %v122 = vunpack.c.l.b16 %v79
    %v123 = vunpack.c.h.b16 %v79
    %v124 = vunpack.c.l.b16 %v80
    %v125 = vunpack.c.h.b16 %v80
    %v126 = vunpack.c.l.b16 %v81
    %v127 = vunpack.c.h.b16 %v81
    %v128 = vunpack.c.l.b16 %v82
    %v129 = vunpack.c.h.b16 %v82
    %v130 = vunpack.c.l.b16 %v83
    %v131 = vunpack.c.h.b16 %v83
    %v132 = vpack.c.b16 %v102, %v100
    %v133 = vpack.c.b16 %v103, %v101
    %v134 = vpack.c.b16 %v106, %v104
    %v135 = vpack.c.b16 %v107, %v105
    %v136 = vpack.c.b16 %v110, %v108
    %v137 = vpack.c.b16 %v111, %v109
    %v138 = vpack.c.b16 %v114, %v112
    %v139 = vpack.c.b16 %v115, %v113
    %v140 = vpack.c.b16 %v118, %v116
    %v141 = vpack.c.b16 %v119, %v117
    %v142 = vpack.c.b16 %v122, %v120
    %v143 = vpack.c.b16 %v123, %v121
    %v144 = vpack.c.b16 %v126, %v124
    %v145 = vpack.c.b16 %v127, %v125
    %v146 = vpack.c.b16 %v130, %v128
    %v147 = vpack.c.b16 %v131, %v129
    %164 = vmatprep.subr.bf16.mxu0 %v147
    %165 = vmatpush1.bf16.msra.mxu0 %v146
    %166 = vmatprep.subr.bf16.mxu0 %v145
    %167 = vmatpush1.bf16.msra.mxu0 %v144
    %168 = vmatprep.subr.bf16.mxu0 %v143
    %169 = vmatpush1.bf16.msra.mxu0 %v142
    %170 = vmatprep.subr.bf16.mxu0 %v141
    %171 = vmatpush1.bf16.msra.mxu0 %v140
    %172 = vmatprep.subr.bf16.mxu0 %v139
    %173 = vmatpush1.bf16.msra.mxu0 %v138
    %174 = vmatprep.subr.bf16.mxu0 %v137
    %175 = vmatpush1.bf16.msra.mxu0 %v136
    %176 = vmatprep.subr.bf16.mxu0 %v135
    %177 = vmatpush1.bf16.msra.mxu0 %v134
    %178 = vmatprep.subr.bf16.mxu0 %v133
    %179 = vmatpush1.bf16.msra.mxu0 %v132
    %180 = vmatprep.subr.bf16.mxu0 0
    %181 = vmatpush2.bf16.msra.mxu0 0
    %182 = vmatprep.subr.bf16.mxu0 0
    %183 = vmatpush2.bf16.msra.mxu0 0
    %184 = vmatprep.subr.bf16.mxu0 0
    %185 = vmatpush2.bf16.msra.mxu0 0
    %186 = vmatprep.subr.bf16.mxu0 0
    %187 = vmatpush2.bf16.msra.mxu0 0
    %188 = vmatprep.subr.bf16.mxu0 0
    %189 = vmatpush2.bf16.msra.mxu0 0
    %190 = vmatprep.subr.bf16.mxu0 0
    %191 = vmatpush2.bf16.msra.mxu0 0
    %192 = vmatprep.subr.bf16.mxu0 0
    %193 = vmatpush2.bf16.msra.mxu0 0
    %194 = vmatprep.subr.bf16.mxu0 0
    %195 = vmatpush2.bf16.msra.mxu0 0
    %196 = vmatprep.mubr.bf16.mxu0 0
    %197 = vmatmul.mubr.bf16.gmra.mxu0 %v67
    %v198 = vpop.f32.mrf.mxu0
    %v199 = vadd.f32 0.0, %v198
    %v200 = vpop.f32.mrf.mxu0
    %v201 = vadd.f32 0.0, %v200
    %v202 = vpop.f32.mrf.mxu0
    %v203 = vadd.f32 0.0, %v202
    %v204 = vpop.f32.mrf.mxu0
    %v205 = vadd.f32 0.0, %v204
    %206 = vdwg.mxu0
    %v207 = vld [vmem:[#allocation5] sm:$0xff]
    %v208 = vld [vmem:[#allocation5 + $0x8] sm:$0xff]
    %v209 = vld [vmem:[#allocation5 + $0x10] sm:$0xff]
    %v210 = vld [vmem:[#allocation5 + $0x18] sm:$0xff]
    %v211 = vld [vmem:[#allocation5 + $0x20] sm:$0xff]
    %v212 = vld [vmem:[#allocation5 + $0x28] sm:$0xff]
    %v213 = vld [vmem:[#allocation5 + $0x30] sm:$0xff]
    %v214 = vld [vmem:[#allocation5 + $0x38] sm:$0xff]
    %v215 = vld [vmem:[#allocation5 + $0x40] sm:$0xff]
    %v216 = vld [vmem:[#allocation5 + $0x48] sm:$0xff]
    %v217 = vld [vmem:[#allocation5 + $0x50] sm:$0xff]
    %v218 = vld [vmem:[#allocation5 + $0x58] sm:$0xff]
    %v219 = vld [vmem:[#allocation5 + $0x60] sm:$0xff]
    %v220 = vld [vmem:[#allocation5 + $0x68] sm:$0xff]
    %v221 = vld [vmem:[#allocation5 + $0x70] sm:$0xff]
    %v222 = vld [vmem:[#allocation5 + $0x78] sm:$0xff]
    %v239 = vunpack.c.l.b16 %v207
    %v240 = vunpack.c.h.b16 %v207
    %v241 = vunpack.c.l.b16 %v208
    %v242 = vunpack.c.h.b16 %v208
    %v243 = vunpack.c.l.b16 %v209
    %v244 = vunpack.c.h.b16 %v209
    %v245 = vunpack.c.l.b16 %v210
    %v246 = vunpack.c.h.b16 %v210
    %v247 = vunpack.c.l.b16 %v211
    %v248 = vunpack.c.h.b16 %v211
    %v249 = vunpack.c.l.b16 %v212
    %v250 = vunpack.c.h.b16 %v212
    %v251 = vunpack.c.l.b16 %v213
    %v252 = vunpack.c.h.b16 %v213
    %v253 = vunpack.c.l.b16 %v214
    %v254 = vunpack.c.h.b16 %v214
    %v255 = vunpack.c.l.b16 %v215
    %v256 = vunpack.c.h.b16 %v215
    %v257 = vunpack.c.l.b16 %v216
    %v258 = vunpack.c.h.b16 %v216
    %v259 = vunpack.c.l.b16 %v217
    %v260 = vunpack.c.h.b16 %v217
    %v261 = vunpack.c.l.b16 %v218
    %v262 = vunpack.c.h.b16 %v218
    %v263 = vunpack.c.l.b16 %v219
    %v264 = vunpack.c.h.b16 %v219
    %v265 = vunpack.c.l.b16 %v220
    %v266 = vunpack.c.h.b16 %v220
    %v267 = vunpack.c.l.b16 %v221
    %v268 = vunpack.c.h.b16 %v221
    %v269 = vunpack.c.l.b16 %v222
    %v270 = vunpack.c.h.b16 %v222
    %v271 = vpack.c.b16 %v241, %v239
    %v272 = vpack.c.b16 %v242, %v240
    %v273 = vpack.c.b16 %v245, %v243
    %v274 = vpack.c.b16 %v246, %v244
    %v275 = vpack.c.b16 %v249, %v247
    %v276 = vpack.c.b16 %v250, %v248
    %v277 = vpack.c.b16 %v253, %v251
    %v278 = vpack.c.b16 %v254, %v252
    %v279 = vpack.c.b16 %v257, %v255
    %v280 = vpack.c.b16 %v258, %v256
    %v281 = vpack.c.b16 %v261, %v259
    %v282 = vpack.c.b16 %v262, %v260
    %v283 = vpack.c.b16 %v265, %v263
    %v284 = vpack.c.b16 %v266, %v264
    %v285 = vpack.c.b16 %v269, %v267
    %v286 = vpack.c.b16 %v270, %v268
    %303 = vmatprep.subr.bf16.mxu0 %v286
    %304 = vmatpush1.bf16.msra.mxu0 %v285
    %305 = vmatprep.subr.bf16.mxu0 %v284
    %306 = vmatpush1.bf16.msra.mxu0 %v283
    %307 = vmatprep.subr.bf16.mxu0 %v282
    %308 = vmatpush1.bf16.msra.mxu0 %v281
    %309 = vmatprep.subr.bf16.mxu0 %v280
    %310 = vmatpush1.bf16.msra.mxu0 %v279
    %311 = vmatprep.subr.bf16.mxu0 %v278
    %312 = vmatpush1.bf16.msra.mxu0 %v277
    %313 = vmatprep.subr.bf16.mxu0 %v276
    %314 = vmatpush1.bf16.msra.mxu0 %v275
    %315 = vmatprep.subr.bf16.mxu0 %v274
    %316 = vmatpush1.bf16.msra.mxu0 %v273
    %317 = vmatprep.subr.bf16.mxu0 %v272
    %318 = vmatpush1.bf16.msra.mxu0 %v271
    %319 = vmatprep.subr.bf16.mxu0 0
    %320 = vmatpush2.bf16.msra.mxu0 0
    %321 = vmatprep.subr.bf16.mxu0 0
    %322 = vmatpush2.bf16.msra.mxu0 0
    %323 = vmatprep.subr.bf16.mxu0 0
    %324 = vmatpush2.bf16.msra.mxu0 0
    %325 = vmatprep.subr.bf16.mxu0 0
    %326 = vmatpush2.bf16.msra.mxu0 0
    %327 = vmatprep.subr.bf16.mxu0 0
    %328 = vmatpush2.bf16.msra.mxu0 0
    %329 = vmatprep.subr.bf16.mxu0 0
    %330 = vmatpush2.bf16.msra.mxu0 0
    %331 = vmatprep.subr.bf16.mxu0 0
    %332 = vmatpush2.bf16.msra.mxu0 0
    %333 = vmatprep.subr.bf16.mxu0 0
    %334 = vmatpush2.bf16.msra.mxu0 0
    %335 = vmatprep.mubr.bf16.mxu0 0
    %336 = vmatmul.mubr.bf16.gmra.mxu0 %v67
    %v337 = vpop.f32.mrf.mxu0
    %v338 = vadd.f32 0.0, %v337
    %v339 = vpop.f32.mrf.mxu0
    %v340 = vadd.f32 0.0, %v339
    %v341 = vpop.f32.mrf.mxu0
    %v342 = vadd.f32 0.0, %v341
    %v343 = vpop.f32.mrf.mxu0
    %v344 = vadd.f32 0.0, %v343
    %345 = vdwg.mxu0
    %v346 = vxor.u32 %v199, 2147483648
    %v347 = vxor.u32 %v201, 2147483648
    %v348 = vxor.u32 %v203, 2147483648
    %v349 = vxor.u32 %v205, 2147483648
    %v350 = vmul.f32 %v346, 1.442695
    %v351 = vpow.pop %v350
    %v352 = vmul.f32 %v347, 1.442695
    %v353 = vpow.pop %v352
    %v354 = vmul.f32 %v348, 1.442695
    %v355 = vpow.pop %v354
    %v356 = vmul.f32 %v349, 1.442695
    %v357 = vpow.pop %v356
    %v358 = vadd.f32 %v351, 1.0
    %v359 = vadd.f32 %v353, 1.0
    %v360 = vadd.f32 %v355, 1.0
    %v361 = vadd.f32 %v357, 1.0
    %v362 = vrcp.pop %v358
    %v363 = vmul.f32 1.0, %v362
    %v364 = vrcp.pop %v359
    %v365 = vmul.f32 1.0, %v364
    %v366 = vrcp.pop %v360
    %v367 = vmul.f32 1.0, %v366
    %v368 = vrcp.pop %v361
    %v369 = vmul.f32 1.0, %v368
    %v370 = vmul.f32 %v199, %v363
    %v371 = vmul.f32 %v201, %v365
    %v372 = vmul.f32 %v203, %v367
    %v373 = vmul.f32 %v205, %v369
    %v374 = vmul.f32 %v370, %v338
    %v375 = vmul.f32 %v371, %v340
    %v376 = vmul.f32 %v372, %v342
    %v377 = vmul.f32 %v373, %v344
    %v378 = vld [vmem:[#allocation2] sm:$0xff]
    %v379 = vld [vmem:[#allocation2 + $0x8] sm:$0xff]
    %v380 = vpack.c.bf16 %v376, %v374
    %v381 = vpack.c.bf16 %v377, %v375
    %v382 = vld [vmem:[#allocation7] sm:$0xf]
    %v383 = vld [vmem:[#allocation7 + $0x4] sm:$0xf]
    %v384 = vld [vmem:[#allocation7 + $0x8] sm:$0xf]
    %v385 = vld [vmem:[#allocation7 + $0xc] sm:$0xf]
    %v386 = vld [vmem:[#allocation7 + $0x10] sm:$0xf]
    %v387 = vld [vmem:[#allocation7 + $0x14] sm:$0xf]
    %v388 = vld [vmem:[#allocation7 + $0x18] sm:$0xf]
    %v389 = vld [vmem:[#allocation7 + $0x1c] sm:$0xf]
    %v390 = vld [vmem:[#allocation7 + $0x20] sm:$0xf]
    %v391 = vld [vmem:[#allocation7 + $0x24] sm:$0xf]
    %v392 = vld [vmem:[#allocation7 + $0x28] sm:$0xf]
    %v393 = vld [vmem:[#allocation7 + $0x2c] sm:$0xf]
    %v394 = vld [vmem:[#allocation7 + $0x30] sm:$0xf]
    %v395 = vld [vmem:[#allocation7 + $0x34] sm:$0xf]
    %v396 = vld [vmem:[#allocation7 + $0x38] sm:$0xf]
    %v397 = vld [vmem:[#allocation7 + $0x3c] sm:$0xf]
    %v398 = vld [vmem:[#allocation7 + $0x40] sm:$0xf]
    %v399 = vld [vmem:[#allocation7 + $0x44] sm:$0xf]
    %v400 = vld [vmem:[#allocation7 + $0x48] sm:$0xf]
    %v401 = vld [vmem:[#allocation7 + $0x4c] sm:$0xf]
    %v402 = vld [vmem:[#allocation7 + $0x50] sm:$0xf]
    %v403 = vld [vmem:[#allocation7 + $0x54] sm:$0xf]
    %v404 = vld [vmem:[#allocation7 + $0x58] sm:$0xf]
    %v405 = vld [vmem:[#allocation7 + $0x5c] sm:$0xf]
    %v406 = vld [vmem:[#allocation7 + $0x60] sm:$0xf]
    %v407 = vld [vmem:[#allocation7 + $0x64] sm:$0xf]
    %v408 = vld [vmem:[#allocation7 + $0x68] sm:$0xf]
    %v409 = vld [vmem:[#allocation7 + $0x6c] sm:$0xf]
    %v410 = vld [vmem:[#allocation7 + $0x70] sm:$0xf]
    %v411 = vld [vmem:[#allocation7 + $0x74] sm:$0xf]
    %v412 = vld [vmem:[#allocation7 + $0x78] sm:$0xf]
    %v413 = vld [vmem:[#allocation7 + $0x7c] sm:$0xf]
    %v446 = vunpack.c.l.b16 %v382
    %v447 = vunpack.c.l.b16 %v383
    %v448 = vunpack.c.l.b16 %v384
    %v449 = vunpack.c.l.b16 %v385
    %v450 = vunpack.c.l.b16 %v386
    %v451 = vunpack.c.l.b16 %v387
    %v452 = vunpack.c.l.b16 %v388
    %v453 = vunpack.c.l.b16 %v389
    %v454 = vunpack.c.l.b16 %v390
    %v455 = vunpack.c.l.b16 %v391
    %v456 = vunpack.c.l.b16 %v392
    %v457 = vunpack.c.l.b16 %v393
    %v458 = vunpack.c.l.b16 %v394
    %v459 = vunpack.c.l.b16 %v395
    %v460 = vunpack.c.l.b16 %v396
    %v461 = vunpack.c.l.b16 %v397
    %v462 = vunpack.c.l.b16 %v398
    %v463 = vunpack.c.l.b16 %v399
    %v464 = vunpack.c.l.b16 %v400
    %v465 = vunpack.c.l.b16 %v401
    %v466 = vunpack.c.l.b16 %v402
    %v467 = vunpack.c.l.b16 %v403
    %v468 = vunpack.c.l.b16 %v404
    %v469 = vunpack.c.l.b16 %v405
    %v470 = vunpack.c.l.b16 %v406
    %v471 = vunpack.c.l.b16 %v407
    %v472 = vunpack.c.l.b16 %v408
    %v473 = vunpack.c.l.b16 %v409
    %v474 = vunpack.c.l.b16 %v410
    %v475 = vunpack.c.l.b16 %v411
    %v476 = vunpack.c.l.b16 %v412
    %v477 = vunpack.c.l.b16 %v413
    %v478 = vpack.c.b16 %v447, %v446
    %v479 = vpack.c.b16 %v449, %v448
    %v480 = vpack.c.b16 %v451, %v450
    %v481 = vpack.c.b16 %v453, %v452
    %v482 = vpack.c.b16 %v455, %v454
    %v483 = vpack.c.b16 %v457, %v456
    %v484 = vpack.c.b16 %v459, %v458
    %v485 = vpack.c.b16 %v461, %v460
    %v486 = vpack.c.b16 %v463, %v462
    %v487 = vpack.c.b16 %v465, %v464
    %v488 = vpack.c.b16 %v467, %v466
    %v489 = vpack.c.b16 %v469, %v468
    %v490 = vpack.c.b16 %v471, %v470
    %v491 = vpack.c.b16 %v473, %v472
    %v492 = vpack.c.b16 %v475, %v474
    %v493 = vpack.c.b16 %v477, %v476
    %510 = vmatprep.subr.bf16.mxu0 0
    %511 = vmatpush1.bf16.msra.mxu0 %v485
    %512 = vmatprep.subr.bf16.mxu0 0
    %513 = vmatpush1.bf16.msra.mxu0 %v484
    %514 = vmatprep.subr.bf16.mxu0 0
    %515 = vmatpush1.bf16.msra.mxu0 %v483
    %516 = vmatprep.subr.bf16.mxu0 0
    %517 = vmatpush1.bf16.msra.mxu0 %v482
    %518 = vmatprep.subr.bf16.mxu0 0
    %519 = vmatpush1.bf16.msra.mxu0 %v481
    %520 = vmatprep.subr.bf16.mxu0 0
    %521 = vmatpush1.bf16.msra.mxu0 %v480
    %522 = vmatprep.subr.bf16.mxu0 0
    %523 = vmatpush1.bf16.msra.mxu0 %v479
    %524 = vmatprep.subr.bf16.mxu0 0
    %525 = vmatpush1.bf16.msra.mxu0 %v478
    %526 = vmatprep.subr.bf16.mxu0 0
    %527 = vmatpush2.bf16.msra.mxu0 %v493
    %528 = vmatprep.subr.bf16.mxu0 0
    %529 = vmatpush2.bf16.msra.mxu0 %v492
    %530 = vmatprep.subr.bf16.mxu0 0
    %531 = vmatpush2.bf16.msra.mxu0 %v491
    %532 = vmatprep.subr.bf16.mxu0 0
    %533 = vmatpush2.bf16.msra.mxu0 %v490
    %534 = vmatprep.subr.bf16.mxu0 0
    %535 = vmatpush2.bf16.msra.mxu0 %v489
    %536 = vmatprep.subr.bf16.mxu0 0
    %537 = vmatpush2.bf16.msra.mxu0 %v488
    %538 = vmatprep.subr.bf16.mxu0 0
    %539 = vmatpush2.bf16.msra.mxu0 %v487
    %540 = vmatprep.subr.bf16.mxu0 0
    %541 = vmatpush2.bf16.msra.mxu0 %v486
    %542 = vmatprep.mubr.bf16.mxu0 %v381
    %543 = vmatmul.mubr.bf16.gmra.mxu0 %v380
    %v544 = vpop.f32.mrf.mxu0
    %v545 = vadd.f32 0.0, %v544
    %v546 = vpop.f32.mrf.mxu0
    %v547 = vpop.f32.mrf.mxu0
    %v548 = vadd.f32 0.0, %v547
    %v549 = vpop.f32.mrf.mxu0
    %550 = vdwg.mxu0
    %v551 = vadd.f32 %v378, %v545
    %v552 = vadd.f32 %v379, %v548
    %553 = vst [vmem:[#allocation2] sm:$0xff] %v551
    %554 = vst [vmem:[#allocation2 + $0x8] sm:$0xff] %v552
    // Predicated region
    $region34: #{swiglu_ffn.1} parent=1 // pred_check
      %p555 = pneg %p59
    $region35: #{swiglu_ffn.1} parent=1 // pred_check_branch
      %557 = sbr.rel (%p555) target = $region37
    $region36: #{swiglu_ffn.1} parent=1 // pred_region
      %v558 = vld [vmem:[#allocation2] sm:$0xff]
      %v559 = vld [vmem:[#allocation2 + $0x8] sm:$0xff]
      %560 = vst [vmem:[%s4] sm:$0xff] %v558
      %561 = vst [vmem:[%s4 + $0x8] sm:$0xff] %v559
    $region37: #{swiglu_ffn.1} parent=1 // pred_fallthru
      _
    // Predicated region
    $region38: #{swiglu_ffn.1} parent=1 // pred_check
      _
    $region39: #{swiglu_ffn.1} parent=1 // pred_check_branch
      %563 = sbr.rel (0) target = $region41
    $region40: #{swiglu_ffn.1} parent=1 // pred_region
      _
    $region41: #{swiglu_ffn.1} parent=1 // pred_fallthru
      _
    // Predicated region
    $region42: #{swiglu_ffn.1} parent=1 // pred_check
      _
    $region43: #{swiglu_ffn.1} parent=1 // pred_check_branch
      %565 = sbr.rel (0) target = $region45
    $region44: #{swiglu_ffn.1} parent=1 // pred_region
      _
    $region45: #{swiglu_ffn.1} parent=1 // pred_fallthru
      _
    %566 = vsyncpa [#allocation4], 1
    %567 = vsyncpa [#allocation6], 1

</llo_original>
